<compile_context>
chip_gen: v5e
topology: v5e:2x2
jax: 0.10.0
libtpu: 0.0.40
codegen_flags: <defaults>
</compile_context>

<pallas_src>
import functools

import jax
import jax.numpy as jnp
import numpy as np
from jax import lax
from jax.experimental import pallas as pl
from jax.experimental.pallas import tpu as pltpu


# --------------------------------------------------------------------------------------
# helpers
# --------------------------------------------------------------------------------------
def _layernorm(x, gamma, beta, eps=1e-6):
    mean = jnp.mean(x, axis=-1, keepdims=True)
    var = jnp.mean((x - mean) ** 2, axis=-1, keepdims=True)
    return (x - mean) * lax.rsqrt(var + eps) * gamma + beta


def _seq_tile(s, cap):
    """Largest multiple-of-8 divisor of s that is <= cap (or s itself if s <= cap)."""
    if s <= cap:
        return s
    t = (cap // 8) * 8
    while t >= 8 and s % t != 0:
        t -= 8
    return t if (t >= 8 and s % t == 0) else s


def _tpu_generation():
    try:
        kind = jax.devices()[0].device_kind.lower()
    except Exception:
        return None
    for gen in ("v7", "v6", "v5"):
        if gen in kind:
            return gen
    return None


def _vmem_limit_bytes(gen):
    if gen == "v7":          # 64 MiB physical VMEM -> leave headroom
        return 56 * 1024 * 1024
    if gen in ("v5", "v6"):  # 128 MiB physical VMEM
        return 96 * 1024 * 1024
    return None              # unknown: keep compiler default


def _default_tiles(gen):
    # (q_tile, k_tile, row_tile); v5e: 128-deep MXU + single vst slot -> 128x128.
    if gen == "v5":
        return 128, 128, 256
    return 128, 256, 256


# ---- feature probe: single-buffered (grid-constant) operands -------------------------
_SINGLE_BUFFER_OK = None


def _probe_copy_kernel(x_ref, o_ref):
    o_ref[...] = x_ref[...]


def _single_buffer_ok():
    """True iff pl.BlockSpec(..., pipeline_mode=pl.Buffered(1)) compiles/runs here."""
    global _SINGLE_BUFFER_OK
    if _SINGLE_BUFFER_OK is None:
        try:
            spec = pl.BlockSpec((8, 128), lambda i: (0, 0), pipeline_mode=pl.Buffered(1))
            out = pl.pallas_call(
                _probe_copy_kernel,
                out_shape=jax.ShapeDtypeStruct((16, 128), jnp.float32),
                grid=(2,),
                in_specs=[spec],
                out_specs=pl.BlockSpec((8, 128), lambda i: (i, 0)),
            )(jnp.ones((8, 128), jnp.float32))
            jax.block_until_ready(out)
            _SINGLE_BUFFER_OK = True
        except Exception:
            _SINGLE_BUFFER_OK = False
    return _SINGLE_BUFFER_OK


def _const_spec_factory():
    """BlockSpec factory for grid-invariant operands (weights / biases / LN params)."""
    single = _single_buffer_ok()

    def const(arr):
        shape = arr.shape
        imap = lambda *_: (0,) * len(shape)
        if single:
            return pl.BlockSpec(shape, imap, pipeline_mode=pl.Buffered(1))
        return pl.BlockSpec(shape, imap)

    return const


# --------------------------------------------------------------------------------------
# kernel 1: LayerNorm1 + fused QKV projection (scale & query-axis mask folded into Q)
# --------------------------------------------------------------------------------------
def _qkv_proj_kernel(x_ref, mask_ref, ln_g_ref, ln_b_ref,
                     wq_ref, bq_ref, wk_ref, bk_ref, wv_ref, bv_ref,
                     q_ref, k_ref, v_ref):
    xn = _layernorm(x_ref[...], ln_g_ref[...], ln_b_ref[...]).astype(jnp.bfloat16)
    q = jnp.dot(xn, wq_ref[...], preferred_element_type=jnp.float32) + bq_ref[...]
    k = jnp.dot(xn, wk_ref[...], preferred_element_type=jnp.float32) + bk_ref[...]
    v = jnp.dot(xn, wv_ref[...], preferred_element_type=jnp.float32) + bv_ref[...]
    # Query-axis mask (reference: scores.masked_fill(mask == 0, min), mask broadcast
    # over the key axis).  Zeroing a masked query row makes all of its scores equal,
    # so softmax is uniform -- exactly the reference result -- and the flash loop
    # needs no mask operand at all.
    q = jnp.where(mask_ref[...] == 0.0, 0.0, q)
    q_ref[...] = q.astype(jnp.bfloat16)
    k_ref[...] = k.astype(jnp.bfloat16)
    v_ref[...] = v.astype(jnp.bfloat16)


# --------------------------------------------------------------------------------------
# kernel 2: flash attention (online softmax over key tiles, bf16 MXU / f32 accum)
# --------------------------------------------------------------------------------------
def _flash_attn_kernel(q_ref, k_ref, v_ref, o_ref, m_scr, l_scr, acc_scr,
                       *, n_heads, head_dim):
    ki = pl.program_id(2)
    nk = pl.num_programs(2)

    @pl.when(ki == 0)
    def _init():
        m_scr[...] = jnp.full_like(m_scr, -1e30)   # finite: avoids inf-inf -> NaN
        l_scr[...] = jnp.zeros_like(l_scr)
        acc_scr[...] = jnp.zeros_like(acc_scr)

    q = q_ref[...]                 # [TQ, D] bf16 (scale + query mask folded in)
    k = k_ref[...]                 # [TK, D] bf16
    v = v_ref[...]                 # [TK, D] bf16
    m_prev = m_scr[...]            # [TQ, H] f32
    l_prev = l_scr[...]            # [TQ, H] f32
    tq = q.shape[0]

    dn = (((1,), (1,)), ((), ()))  # contract last dims -> q @ k^T, no transpose
    pv_parts, alpha_parts, m_cols, l_cols = [], [], [], []
    for h in range(n_heads):
        hs = slice(h * head_dim, (h + 1) * head_dim)
        s = lax.dot_general(q[:, hs], k[:, hs], dimension_numbers=dn,
                            preferred_element_type=jnp.float32)           # [TQ, TK]
        m_p = m_prev[:, h:h + 1]
        m_n = jnp.maximum(m_p, jnp.max(s, axis=-1, keepdims=True))
        alpha = jnp.exp(m_p - m_n)                                         # [TQ, 1]
        p = jnp.exp(s - m_n)                                               # [TQ, TK]
        pv_parts.append(jnp.dot(p.astype(jnp.bfloat16), v[:, hs],
                                preferred_element_type=jnp.float32))       # [TQ, hd]
        alpha_parts.append(jnp.broadcast_to(alpha, (tq, head_dim)))
        m_cols.append(m_n)
        l_cols.append(alpha * l_prev[:, h:h + 1] + jnp.sum(p, axis=-1, keepdims=True))

    # Single full-width scratch updates (no per-head masked sub-lane stores).
    acc_scr[...] = (jnp.concatenate(alpha_parts, axis=-1) * acc_scr[...]
                    + jnp.concatenate(pv_parts, axis=-1))
    m_scr[...] = jnp.concatenate(m_cols, axis=-1)
    l_scr[...] = jnp.concatenate(l_cols, axis=-1)

    @pl.when(ki == nk - 1)
    def _finalize():
        inv_l = pl.reciprocal(l_scr[...], approx=True)                     # [TQ, H]
        inv_b = jnp.concatenate(
            [jnp.broadcast_to(inv_l[:, h:h + 1], (tq, head_dim))
             for h in range(n_heads)], axis=-1)                            # [TQ, D]
        o_ref[...] = (acc_scr[...] * inv_b).astype(o_ref.dtype)


# --------------------------------------------------------------------------------------
# kernel 3: attention out-projection + residual + LN2 + SwishGLU MLP + residual
# --------------------------------------------------------------------------------------
def _post_mlp_kernel(x_ref, attn_ref,
                     wproj_ref, bproj_ref,
                     ln2_g_ref, ln2_b_ref,
                     wglu_ref, bglu_ref,
                     wout_ref, bout_ref,
                     o_ref, *, hidden):
    y = jnp.dot(attn_ref[...], wproj_ref[...],
                preferred_element_type=jnp.float32) + bproj_ref[...]
    x1 = x_ref[...] + y                                            # residual 1 (f32)

    xn2 = _layernorm(x1, ln2_g_ref[...], ln2_b_ref[...]).astype(jnp.bfloat16)
    glu = jnp.dot(xn2, wglu_ref[...],
                  preferred_element_type=jnp.float32) + bglu_ref[...]
    projected, gate = glu[:, :hidden], glu[:, hidden:]
    g = projected * (gate * jax.nn.sigmoid(gate))                  # SiLU gate (f32/EUP)
    mlp = jnp.dot(g.astype(jnp.bfloat16), wout_ref[...],
                  preferred_element_type=jnp.float32) + bout_ref[...]
    # TODO(synk): tile wglu/wout over the hidden dim for very large D on v7x.
    o_ref[...] = (x1 + mlp).astype(o_ref.dtype)                    # residual 2


# --------------------------------------------------------------------------------------
# wrapper
# --------------------------------------------------------------------------------------
def transformer_block(x, mask, params, *, n_heads,
                      q_tile=None, k_tile=None, row_tile=None):
    B, S, D = x.shape
    assert D % n_heads == 0
    head_dim = D // n_heads
    scale = float(head_dim) ** -0.5
    hidden = params["wglu"].shape[0] // 2

    gen = _tpu_generation()
    dq, dk, dr = _default_tiles(gen)
    TQ = _seq_tile(S, q_tile or dq)
    TK = _seq_tile(S, k_tile or dk)
    TR = _seq_tile(S, row_tile or dr)
    nq, nk, nr = S // TQ, S // TK, S // TR
    vmem_limit = _vmem_limit_bytes(gen)

    if mask is None:
        mask = jnp.ones((B, S), dtype=jnp.float32)
    mask3 = mask.astype(jnp.float32).reshape(B, S, 1)

    # ---- host-side parameter prep: split QKV, fold attention scale into Q, bf16 weights
    wqkv, bqkv = params["wqkv"], params["bqkv"]
    wq_t = (wqkv[:D].T * scale).astype(jnp.bfloat16)
    wk_t = wqkv[D:2 * D].T.astype(jnp.bfloat16)
    wv_t = wqkv[2 * D:].T.astype(jnp.bfloat16)
    wproj_t = params["wproj"].T.astype(jnp.bfloat16)       # [D, D]
    wglu_t = params["wglu"].T.astype(jnp.bfloat16)         # [D, 2*hidden]
    wout_t = params["wout"].T.astype(jnp.bfloat16)         # [hidden, D]

    row = lambda a: a.reshape(1, -1).astype(jnp.float32)
    bq_row, bk_row, bv_row = row(bqkv[:D] * scale), row(bqkv[D:2 * D]), row(bqkv[2 * D:])
    ln1_g, ln1_b = row(params["ln1_g"]), row(params["ln1_b"])
    ln2_g, ln2_b = row(params["ln2_g"]), row(params["ln2_b"])
    bproj_row, bglu_row, bout_row = (row(params["bproj"]), row(params["bglu"]),
                                     row(params["bout"]))

    const = _const_spec_factory()
    cparams = lambda sem: pltpu.CompilerParams(
        dimension_semantics=sem, vmem_limit_bytes=vmem_limit)
    row_spec = lambda t, d: pl.BlockSpec((None, t, d), lambda b, i: (b, i, 0))

    # ---- kernel 1: LN1 + QKV projection (K/V hoisted out of the flash key-tile loop,
    # streamed later as bf16 = half the bytes of re-fetching f32 x) ----
    proj_cost = pl.CostEstimate(
        flops=6 * B * S * D * D,
        transcendentals=B * S,
        bytes_accessed=B * S * D * 4 + B * S * 4 + 3 * D * D * 2 + 3 * B * S * D * 2)
    q_bf, k_bf, v_bf = pl.pallas_call(
        _qkv_proj_kernel,
        out_shape=(jax.ShapeDtypeStruct((B, S, D), jnp.bfloat16),) * 3,
        grid=(B, nr),
        in_specs=[
            row_spec(TR, D),                                       # x rows
            pl.BlockSpec((None, TR, 1), lambda b, i: (b, i, 0)),   # mask rows
            const(ln1_g), const(ln1_b),
            const(wq_t), const(bq_row),
            const(wk_t), const(bk_row),
            const(wv_t), const(bv_row),
        ],
        out_specs=(row_spec(TR, D),) * 3,
        compiler_params=cparams(("parallel", "parallel")),
        cost_estimate=proj_cost,
    )(x, mask3, ln1_g, ln1_b, wq_t, bq_row, wk_t, bk_row, wv_t, bv_row)

    # ---- kernel 2: flash attention over key tiles (online softmax) ----
    attn_cost = pl.CostEstimate(
        flops=4 * B * S * S * D,
        transcendentals=B * n_heads * S * S,
        bytes_accessed=B * S * D * 2 * (2 + 2 * nq))
    attn_bf = pl.pallas_call(
        functools.partial(_flash_attn_kernel, n_heads=n_heads, head_dim=head_dim),
        out_shape=jax.ShapeDtypeStruct((B, S, D), jnp.bfloat16),
        grid=(B, nq, nk),
        in_specs=[
            pl.BlockSpec((None, TQ, D), lambda b, qi, ki: (b, qi, 0)),  # Q tile
            pl.BlockSpec((None, TK, D), lambda b, qi, ki: (b, ki, 0)),  # K tile
            pl.BlockSpec((None, TK, D), lambda b, qi, ki: (b, ki, 0)),  # V tile
        ],
        out_specs=pl.BlockSpec((None, TQ, D), lambda b, qi, ki: (b, qi, 0)),
        scratch_shapes=[
            pltpu.VMEM((TQ, n_heads), jnp.float32),    # running max m
            pltpu.VMEM((TQ, n_heads), jnp.float32),    # running sum l
            pltpu.VMEM((TQ, D), jnp.float32),          # output accumulator
        ],
        compiler_params=cparams(("parallel", "parallel", "arbitrary")),
        cost_estimate=attn_cost,
    )(q_bf, k_bf, v_bf)

    # ---- kernel 3: out-projection + residual + LN2 + SwishGLU MLP + residual ----
    post_cost = pl.CostEstimate(
        flops=2 * B * S * (D * D + 3 * D * hidden),
        transcendentals=B * S * (hidden + 1),
        bytes_accessed=B * S * D * 10 + (D * D + 3 * D * hidden) * 2)
    out = pl.pallas_call(
        functools.partial(_post_mlp_kernel, hidden=hidden),
        out_shape=jax.ShapeDtypeStruct((B, S, D), jnp.float32),
        grid=(B, nr),
        in_specs=[
            row_spec(TR, D),        # x (residual input, f32)
            row_spec(TR, D),        # attention output (bf16)
            const(wproj_t), const(bproj_row),
            const(ln2_g), const(ln2_b),
            const(wglu_t), const(bglu_row),
            const(wout_t), const(bout_row),
        ],
        out_specs=row_spec(TR, D),
        compiler_params=cparams(("parallel", "parallel")),
        cost_estimate=post_cost,
    )(x, attn_bf, wproj_t, bproj_row, ln2_g, ln2_b, wglu_t, bglu_row, wout_t, bout_row)
    return out


# ---------------- pure-JAX reference (mirrors the PyTorch forward, all f32) ----------------
def reference_block(x, mask, params, *, n_heads):
    B, S, D = x.shape
    d = D // n_heads
    scale = float(d) ** -0.5

    def ln(v, g, b):
        mu = jnp.mean(v, axis=-1, keepdims=True)
        var = jnp.mean((v - mu) ** 2, axis=-1, keepdims=True)
        return (v - mu) / jnp.sqrt(var + 1e-6) * g + b

    xn = ln(x, params["ln1_g"], params["ln1_b"])
    qkv = xn @ params["wqkv"].T + params["bqkv"]
    q, k, v = jnp.split(qkv, 3, axis=-1)
    reshape_h = lambda t: t.reshape(B, S, n_heads, d).transpose(0, 2, 1, 3)
    q, k, v = reshape_h(q), reshape_h(k), reshape_h(v)
    scores = q @ (jnp.swapaxes(k, -2, -1) * scale)
    if mask is not None:
        m4 = mask[:, None, :, None]
        scores = jnp.where(m4 == 0, jnp.finfo(jnp.float32).min, scores)
    attn = jax.nn.softmax(scores, axis=-1)
    out = (attn @ v).transpose(0, 2, 1, 3).reshape(B, S, D)
    x1 = x + out @ params["wproj"].T + params["bproj"]

    xn2 = ln(x1, params["ln2_g"], params["ln2_b"])
    glu = xn2 @ params["wglu"].T + params["bglu"]
    projected, gate = jnp.split(glu, 2, axis=-1)
    g = projected * jax.nn.silu(gate)
    return x1 + g @ params["wout"].T + params["bout"]


if __name__ == "__main__":
    B, S, D, HEADS = 2, 8, 32, 4
    HIDDEN = int(4.0 * D)

    key = jax.random.PRNGKey(0)
    keys = jax.random.split(key, 12)

    params = {
        "ln1_g": jnp.ones((D,), jnp.float32),
        "ln1_b": jnp.zeros((D,), jnp.float32),
        "wqkv": 0.05 * jax.random.normal(keys[0], (3 * D, D), jnp.float32),
        "bqkv": 0.01 * jax.random.normal(keys[1], (3 * D,), jnp.float32),
        "wproj": 0.05 * jax.random.normal(keys[2], (D, D), jnp.float32),
        "bproj": 0.01 * jax.random.normal(keys[3], (D,), jnp.float32),
        "ln2_g": jnp.ones((D,), jnp.float32),
        "ln2_b": jnp.zeros((D,), jnp.float32),
        "wglu": 0.05 * jax.random.normal(keys[4], (2 * HIDDEN, D), jnp.float32),
        "bglu": 0.01 * jax.random.normal(keys[5], (2 * HIDDEN,), jnp.float32),
        "wout": 0.05 * jax.random.normal(keys[6], (D, HIDDEN), jnp.float32),
        "bout": 0.01 * jax.random.normal(keys[7], (D,), jnp.float32),
    }

    x = jax.random.normal(keys[8], (B, S, D), jnp.float32)
    # mask: keep everything except the last two positions of batch 1
    mask = jnp.ones((B, S), jnp.float32).at[1, -2:].set(0.0)

    out = transformer_block(x, mask, params, n_heads=HEADS)
    out = jax.block_until_ready(out)

    ref = reference_block(x, mask, params, n_heads=HEADS)
    # bf16 MXU matmuls / bf16 intermediate Q,K,V,attn vs all-f32 reference: loose tol.
    np.testing.assert_allclose(np.asarray(out), np.asarray(ref), rtol=2e-2, atol=2e-2)

    print("KERNEL_OK")
</pallas_src>

<mosaic_0001>
module attributes {stable_mosaic.version = 11 : i64} {
  func.func @_probe_copy_kernel(%arg0: i32, %arg1: memref<8x128xf32, #tpu.memory_space<vmem>>, %arg2: memref<8x128xf32, #tpu.memory_space<vmem>>) attributes {dimension_semantics = [#tpu.dimension_semantics<arbitrary>], iteration_bounds = array<i64: 2>, scalar_prefetch = 0 : i64, scratch_operands = 0 : i64, tpu.core_type = #tpu.core_type<tc>, window_params = [{pipeline_mode = #tpu.pipeline_mode<synchronous>, transform_indices = @transform_0, window_bounds = array<i64: 8, 128>}, {transform_indices = @transform_1, window_bounds = array<i64: 8, 128>}]} {
    %c0 = arith.constant 0 : index
    %c0_0 = arith.constant 0 : index
    %0 = vector.load %arg1[%c0, %c0_0] : memref<8x128xf32, #tpu.memory_space<vmem>>, vector<8x128xf32>
    %c0_1 = arith.constant 0 : index
    %c0_2 = arith.constant 0 : index
    %1 = vector.load %arg2[%c0_1, %c0_2] : memref<8x128xf32, #tpu.memory_space<vmem>>, vector<8x128xf32>
    tpu.vector_store %arg2[%c0_1, %c0_2], %0 {strides = array<i32>} : memref<8x128xf32, #tpu.memory_space<vmem>>, vector<8x128xf32>,
    return
  }
  func.func @transform_0(%arg0: i32) -> (i32, i32) {
    %c0_i32 = arith.constant 0 : i32
    %c0_i32_0 = arith.constant 0 : i32
    %c0_i32_1 = arith.constant 0 : i32
    return %c0_i32, %c0_i32_0 : i32, i32
  }
  func.func @transform_1(%arg0: i32) -> (i32, i32) {
    %c0_i32 = arith.constant 0 : i32
    %c0_i32_0 = arith.constant 0 : i32
    return %arg0, %c0_i32 : i32, i32
  }
}

module attributes {stable_mosaic.version = 11 : i64} {
  func.func @_qkv_proj_kernel(%arg0: i32, %arg1: i32, %arg2: memref<1x8x32xf32, #tpu.memory_space<vmem>>, %arg3: memref<1x8x1xf32, #tpu.memory_space<vmem>>, %arg4: memref<1x32xf32, #tpu.memory_space<vmem>>, %arg5: memref<1x32xf32, #tpu.memory_space<vmem>>, %arg6: memref<32x32xbf16, #tpu.memory_space<vmem>>, %arg7: memref<1x32xf32, #tpu.memory_space<vmem>>, %arg8: memref<32x32xbf16, #tpu.memory_space<vmem>>, %arg9: memref<1x32xf32, #tpu.memory_space<vmem>>, %arg10: memref<32x32xbf16, #tpu.memory_space<vmem>>, %arg11: memref<1x32xf32, #tpu.memory_space<vmem>>, %arg12: memref<1x8x32xbf16, #tpu.memory_space<vmem>>, %arg13: memref<1x8x32xbf16, #tpu.memory_space<vmem>>, %arg14: memref<1x8x32xbf16, #tpu.memory_space<vmem>>) attributes {dimension_semantics = [#tpu.dimension_semantics<parallel>, #tpu.dimension_semantics<parallel>], iteration_bounds = array<i64: 2, 1>, scalar_prefetch = 0 : i64, scratch_operands = 0 : i64, tpu.core_type = #tpu.core_type<tc>, window_params = [{transform_indices = @transform_0, window_bounds = array<i64: 1, 8, 32>}, {transform_indices = @transform_1, window_bounds = array<i64: 1, 8, 1>}, {pipeline_mode = #tpu.pipeline_mode<synchronous>, transform_indices = @transform_2, window_bounds = array<i64: 1, 32>}, {pipeline_mode = #tpu.pipeline_mode<synchronous>, transform_indices = @transform_3, window_bounds = array<i64: 1, 32>}, {pipeline_mode = #tpu.pipeline_mode<synchronous>, transform_indices = @transform_4, window_bounds = array<i64: 32, 32>}, {pipeline_mode = #tpu.pipeline_mode<synchronous>, transform_indices = @transform_5, window_bounds = array<i64: 1, 32>}, {pipeline_mode = #tpu.pipeline_mode<synchronous>, transform_indices = @transform_6, window_bounds = array<i64: 32, 32>}, {pipeline_mode = #tpu.pipeline_mode<synchronous>, transform_indices = @transform_7, window_bounds = array<i64: 1, 32>}, {pipeline_mode = #tpu.pipeline_mode<synchronous>, transform_indices = @transform_8, window_bounds = array<i64: 32, 32>}, {pipeline_mode = #tpu.pipeline_mode<synchronous>, transform_indices = @transform_9, window_bounds = array<i64: 1, 32>}, {transform_indices = @transform_10, window_bounds = array<i64: 1, 8, 32>}, {transform_indices = @transform_11, window_bounds = array<i64: 1, 8, 32>}, {transform_indices = @transform_12, window_bounds = array<i64: 1, 8, 32>}]} {
    %c0 = arith.constant 0 : index
    %c0_0 = arith.constant 0 : index
    %c0_1 = arith.constant 0 : index
    %0 = vector.load %arg2[%c0, %c0_0, %c0_1] : memref<1x8x32xf32, #tpu.memory_space<vmem>>, vector<1x8x32xf32>
    %1 = vector.shape_cast %0 : vector<1x8x32xf32> to vector<8x32xf32>
    %c0_2 = arith.constant 0 : index
    %c0_3 = arith.constant 0 : index
    %2 = vector.load %arg4[%c0_2, %c0_3] : memref<1x32xf32, #tpu.memory_space<vmem>>, vector<1x32xf32>
    %c0_4 = arith.constant 0 : index
    %c0_5 = arith.constant 0 : index
    %3 = vector.load %arg5[%c0_4, %c0_5] : memref<1x32xf32, #tpu.memory_space<vmem>>, vector<1x32xf32>
    %cst = arith.constant dense<0.000000e+00> : vector<8xf32>
    %4 = vector.multi_reduction <add>, %1, %cst [1] : vector<8x32xf32> to vector<8xf32>
    %5 = vector.shape_cast %4 : vector<8xf32> to vector<8x1xf32>
    %cst_6 = arith.constant 3.200000e+01 : f32
    %6 = vector.broadcast %cst_6 : f32 to vector<8x1xf32>
    %7 = arith.divf %5, %6 : vector<8x1xf32>
    %8 = vector.broadcast %7 : vector<8x1xf32> to vector<8x32xf32>
    %9 = arith.subf %1, %8 : vector<8x32xf32>
    %10 = arith.mulf %9, %9 : vector<8x32xf32>
    %cst_7 = arith.constant dense<0.000000e+00> : vector<8xf32>
    %11 = vector.multi_reduction <add>, %10, %cst_7 [1] : vector<8x32xf32> to vector<8xf32>
    %12 = vector.shape_cast %11 : vector<8xf32> to vector<8x1xf32>
    %cst_8 = arith.constant 3.200000e+01 : f32
    %13 = vector.broadcast %cst_8 : f32 to vector<8x1xf32>
    %14 = arith.divf %12, %13 : vector<8x1xf32>
    %15 = vector.broadcast %7 : vector<8x1xf32> to vector<8x32xf32>
    %16 = arith.subf %1, %15 : vector<8x32xf32>
    %cst_9 = arith.constant 9.99999997E-7 : f32
    %17 = vector.broadcast %cst_9 : f32 to vector<8x1xf32>
    %18 = arith.addf %14, %17 : vector<8x1xf32>
    %19 = math.rsqrt %18 : vector<8x1xf32>
    %20 = vector.broadcast %19 : vector<8x1xf32> to vector<8x32xf32>
    %21 = arith.mulf %16, %20 : vector<8x32xf32>
    %22 = vector.broadcast %2 : vector<1x32xf32> to vector<8x32xf32>
    %23 = arith.mulf %21, %22 : vector<8x32xf32>
    %24 = vector.broadcast %3 : vector<1x32xf32> to vector<8x32xf32>
    %25 = arith.addf %23, %24 : vector<8x32xf32>
    %26 = arith.truncf %25 : vector<8x32xf32> to vector<8x32xbf16>
    %c0_10 = arith.constant 0 : index
    %c0_11 = arith.constant 0 : index
    %27 = vector.load %arg6[%c0_10, %c0_11] : memref<32x32xbf16, #tpu.memory_space<vmem>>, vector<32x32xbf16>
    %cst_12 = arith.constant dense<0.000000e+00> : vector<8x32xf32>
    %28 = tpu.matmul %26, %27, %cst_12 {dimension_numbers = #tpu.dot_dimension_numbers<[1], [0], [0], [1], [0, 0, 1, 1], [], []>} : vector<8x32xbf16>, vector<32x32xbf16>, vector<8x32xf32> -> vector<8x32xf32>
    %c0_13 = arith.constant 0 : index
    %c0_14 = arith.constant 0 : index
    %29 = vector.load %arg7[%c0_13, %c0_14] : memref<1x32xf32, #tpu.memory_space<vmem>>, vector<1x32xf32>
    %30 = vector.broadcast %29 : vector<1x32xf32> to vector<8x32xf32>
    %31 = arith.addf %28, %30 : vector<8x32xf32>
    %c0_15 = arith.constant 0 : index
    %c0_16 = arith.constant 0 : index
    %32 = vector.load %arg8[%c0_15, %c0_16] : memref<32x32xbf16, #tpu.memory_space<vmem>>, vector<32x32xbf16>
    %cst_17 = arith.constant dense<0.000000e+00> : vector<8x32xf32>
    %33 = tpu.matmul %26, %32, %cst_17 {dimension_numbers = #tpu.dot_dimension_numbers<[1], [0], [0], [1], [0, 0, 1, 1], [], []>} : vector<8x32xbf16>, vector<32x32xbf16>, vector<8x32xf32> -> vector<8x32xf32>
    %c0_18 = arith.constant 0 : index
    %c0_19 = arith.constant 0 : index
    %34 = vector.load %arg9[%c0_18, %c0_19] : memref<1x32xf32, #tpu.memory_space<vmem>>, vector<1x32xf32>
    %35 = vector.broadcast %34 : vector<1x32xf32> to vector<8x32xf32>
    %36 = arith.addf %33, %35 : vector<8x32xf32>
    %c0_20 = arith.constant 0 : index
    %c0_21 = arith.constant 0 : index
    %37 = vector.load %arg10[%c0_20, %c0_21] : memref<32x32xbf16, #tpu.memory_space<vmem>>, vector<32x32xbf16>
    %cst_22 = arith.constant dense<0.000000e+00> : vector<8x32xf32>
    %38 = tpu.matmul %26, %37, %cst_22 {dimension_numbers = #tpu.dot_dimension_numbers<[1], [0], [0], [1], [0, 0, 1, 1], [], []>} : vector<8x32xbf16>, vector<32x32xbf16>, vector<8x32xf32> -> vector<8x32xf32>
    %c0_23 = arith.constant 0 : index
    %c0_24 = arith.constant 0 : index
    %39 = vector.load %arg11[%c0_23, %c0_24] : memref<1x32xf32, #tpu.memory_space<vmem>>, vector<1x32xf32>
    %40 = vector.broadcast %39 : vector<1x32xf32> to vector<8x32xf32>
    %41 = arith.addf %38, %40 : vector<8x32xf32>
    %c0_25 = arith.constant 0 : index
    %c0_26 = arith.constant 0 : index
    %c0_27 = arith.constant 0 : index
    %42 = vector.load %arg3[%c0_25, %c0_26, %c0_27] : memref<1x8x1xf32, #tpu.memory_space<vmem>>, vector<1x8x1xf32>
    %43 = vector.shape_cast %42 : vector<1x8x1xf32> to vector<8x1xf32>
    %cst_28 = arith.constant 0.000000e+00 : f32
    %44 = vector.broadcast %cst_28 : f32 to vector<8x1xf32>
    %45 = arith.cmpf oeq, %43, %44 : vector<8x1xf32>
    %cst_29 = arith.constant 0.000000e+00 : f32
    %46 = vector.shape_cast %45 : vector<8x1xi1> to vector<8x1xi1>
    %47 = vector.broadcast %46 : vector<8x1xi1> to vector<8x32xi1>
    %48 = vector.broadcast %cst_29 : f32 to vector<8x32xf32>
    %49 = arith.select %47, %48, %31 : vector<8x32xi1>, vector<8x32xf32>
    %50 = arith.truncf %49 : vector<8x32xf32> to vector<8x32xbf16>
    %c0_30 = arith.constant 0 : index
    %c0_31 = arith.constant 0 : index
    %c0_32 = arith.constant 0 : index
    %51 = vector.load %arg12[%c0_30, %c0_31, %c0_32] : memref<1x8x32xbf16, #tpu.memory_space<vmem>>, vector<1x8x32xbf16>
    %52 = vector.shape_cast %51 : vector<1x8x32xbf16> to vector<8x32xbf16>
    %53 = vector.shape_cast %50 : vector<8x32xbf16> to vector<1x8x32xbf16>
    tpu.vector_store %arg12[%c0_30, %c0_31, %c0_32], %53 {strides = array<i32>} : memref<1x8x32xbf16, #tpu.memory_space<vmem>>, vector<1x8x32xbf16>,
    %54 = arith.truncf %36 : vector<8x32xf32> to vector<8x32xbf16>
    %c0_33 = arith.constant 0 : index
    %c0_34 = arith.constant 0 : index
    %c0_35 = arith.constant 0 : index
    %55 = vector.load %arg13[%c0_33, %c0_34, %c0_35] : memref<1x8x32xbf16, #tpu.memory_space<vmem>>, vector<1x8x32xbf16>
    %56 = vector.shape_cast %55 : vector<1x8x32xbf16> to vector<8x32xbf16>
    %57 = vector.shape_cast %54 : vector<8x32xbf16> to vector<1x8x32xbf16>
    tpu.vector_store %arg13[%c0_33, %c0_34, %c0_35], %57 {strides = array<i32>} : memref<1x8x32xbf16, #tpu.memory_space<vmem>>, vector<1x8x32xbf16>,
    %58 = arith.truncf %41 : vector<8x32xf32> to vector<8x32xbf16>
    %c0_36 = arith.constant 0 : index
    %c0_37 = arith.constant 0 : index
    %c0_38 = arith.constant 0 : index
    %59 = vector.load %arg14[%c0_36, %c0_37, %c0_38] : memref<1x8x32xbf16, #tpu.memory_space<vmem>>, vector<1x8x32xbf16>
    %60 = vector.shape_cast %59 : vector<1x8x32xbf16> to vector<8x32xbf16>
    %61 = vector.shape_cast %58 : vector<8x32xbf16> to vector<1x8x32xbf16>
    tpu.vector_store %arg14[%c0_36, %c0_37, %c0_38], %61 {strides = array<i32>} : memref<1x8x32xbf16, #tpu.memory_space<vmem>>, vector<1x8x32xbf16>,
    return
  }
  func.func @transform_0(%arg0: i32, %arg1: i32) -> (i32, i32, i32) {
    %c0_i32 = arith.constant 0 : i32
    %c0_i32_0 = arith.constant 0 : i32
    return %arg0, %arg1, %c0_i32 : i32, i32, i32
  }
  func.func @transform_1(%arg0: i32, %arg1: i32) -> (i32, i32, i32) {
    %c0_i32 = arith.constant 0 : i32
    %c0_i32_0 = arith.constant 0 : i32
    return %arg0, %arg1, %c0_i32 : i32, i32, i32
  }
  func.func @transform_2(%arg0: i32, %arg1: i32) -> (i32, i32) {
    %c0_i32 = arith.constant 0 : i32
    %c0_i32_0 = arith.constant 0 : i32
    %c0_i32_1 = arith.constant 0 : i32
    return %c0_i32, %c0_i32_0 : i32, i32
  }
  func.func @transform_3(%arg0: i32, %arg1: i32) -> (i32, i32) {
    %c0_i32 = arith.constant 0 : i32
    %c0_i32_0 = arith.constant 0 : i32
    %c0_i32_1 = arith.constant 0 : i32
    return %c0_i32, %c0_i32_0 : i32, i32
  }
  func.func @transform_4(%arg0: i32, %arg1: i32) -> (i32, i32) {
    %c0_i32 = arith.constant 0 : i32
    %c0_i32_0 = arith.constant 0 : i32
    %c0_i32_1 = arith.constant 0 : i32
    return %c0_i32, %c0_i32_0 : i32, i32
  }
  func.func @transform_5(%arg0: i32, %arg1: i32) -> (i32, i32) {
    %c0_i32 = arith.constant 0 : i32
    %c0_i32_0 = arith.constant 0 : i32
    %c0_i32_1 = arith.constant 0 : i32
    return %c0_i32, %c0_i32_0 : i32, i32
  }
  func.func @transform_6(%arg0: i32, %arg1: i32) -> (i32, i32) {
    %c0_i32 = arith.constant 0 : i32
    %c0_i32_0 = arith.constant 0 : i32
    %c0_i32_1 = arith.constant 0 : i32
    return %c0_i32, %c0_i32_0 : i32, i32
  }
  func.func @transform_7(%arg0: i32, %arg1: i32) -> (i32, i32) {
    %c0_i32 = arith.constant 0 : i32
    %c0_i32_0 = arith.constant 0 : i32
    %c0_i32_1 = arith.constant 0 : i32
    return %c0_i32, %c0_i32_0 : i32, i32
  }
  func.func @transform_8(%arg0: i32, %arg1: i32) -> (i32, i32) {
    %c0_i32 = arith.constant 0 : i32
    %c0_i32_0 = arith.constant 0 : i32
    %c0_i32_1 = arith.constant 0 : i32
    return %c0_i32, %c0_i32_0 : i32, i32
  }
  func.func @transform_9(%arg0: i32, %arg1: i32) -> (i32, i32) {
    %c0_i32 = arith.constant 0 : i32
    %c0_i32_0 = arith.constant 0 : i32
    %c0_i32_1 = arith.constant 0 : i32
    return %c0_i32, %c0_i32_0 : i32, i32
  }
  func.func @transform_10(%arg0: i32, %arg1: i32) -> (i32, i32, i32) {
    %c0_i32 = arith.constant 0 : i32
    %c0_i32_0 = arith.constant 0 : i32
    return %arg0, %arg1, %c0_i32 : i32, i32, i32
  }
  func.func @transform_11(%arg0: i32, %arg1: i32) -> (i32, i32, i32) {
    %c0_i32 = arith.constant 0 : i32
    %c0_i32_0 = arith.constant 0 : i32
    return %arg0, %arg1, %c0_i32 : i32, i32, i32
  }
  func.func @transform_12(%arg0: i32, %arg1: i32) -> (i32, i32, i32) {
    %c0_i32 = arith.constant 0 : i32
    %c0_i32_0 = arith.constant 0 : i32
    return %arg0, %arg1, %c0_i32 : i32, i32, i32
  }
}

</mosaic_0001>

<llo_original>
// kernel: tpu_custom_call.1
$region0: #{tpu_custom_call.1}
  #allocation0 [shape = 'u32[]', space=smem, size = 0x4, offset = 0x4, fixed_abs, tag = 'smem constant byte address 0x4 - core index']
  #allocation1 [shape = 'u32[72,128]{1,0:T(1,128)}', space=vmem, size = 0x9000, scoped, tag = 'internal scratch']
  %s0 = inlined_call_operand.hbm [shape: f32[8,128], index: 0, kind: input, shape index: {}]
  %s1 = inlined_call_operand.hbm [shape: f32[16,128], index: 1, kind: output, shape index: {}]
  %s2 = sld [smem:[#allocation0]]
  $region41: #{tpu_custom_call.1} parent=0
    _
  %s4 = ssub.s32 1, %s2
  %s5 = scalar_select 0, %s4, %s2
  $region1: #{tpu_custom_call.1} parent=0
    #allocation2 [shape = 'u8[4096]{0}', space=vmem, size = 0x1000, scoped, tag = 'input window, operand 0, single buffered']
    #allocation3 [shape = 's32[2]{0}', space=sflag, size = 0x8, scoped, tag = 'scoped memory for tpu_custom_call.1']
    #allocation4 [shape = 's32[2]{0}', space=sflag, size = 0x8, scoped, tag = 'scoped memory for tpu_custom_call.1']
    #allocation5 [shape = 'u8[8192]{0}', space=vmem, size = 0x2000, scoped, tag = 'output window, operand 0']
    %6 = vsyncpa [#allocation3], 0
    %7 = vsyncpa [#allocation4], 0
    %s8 = scalar_lea.sflag [#allocation4], 1
    %9 = vsyncpa %s8, 0
    loop: start=0, step=1, limit=4
    $region2: #{tpu_custom_call.1} parent=1 // loop_pre_header
      _
    $region3: #{tpu_custom_call.1} parent=1 // loop_header
      %s11 = sphi 0, %s15
      %p12 = scmp.ge.s32.totalorder %s11, 4
      %s19 = sphi 0, %s19
      %s21 = sphi 0, %s19
      %s22 = sphi 0, %s21
      %s36 = sphi 0, %s22
      %s42 = sphi 0, %s44
      %s45 = sphi 0, %s42
      %s46 = sphi 0, %s45
      %s62 = sphi 0, %s46
    $region4: #{tpu_custom_call.1} parent=1 // loop_header_branch
      %14 = sbr.rel (%p12) target = $region8
    $region5: #{tpu_custom_call.1} parent=1 // loop_body
      %s16 = ssub.s32 %s11, 1
      %s17 = ssub.s32 %s11, 2
      %s18 = sadd.s32 %s11, 1
      %s20 = sadd.s32 %s19, 1
      %p23 = scmp.eq.s32.totalorder %s11, 1
      %p24 = scmp.ne.s32.totalorder %s19, %s21
      %p25 = scmp.eq.s32.totalorder %s11, 0
      %p26 = por %p24, %p25
      %p27 = scmp.ne.s32.totalorder %s19, %s21
      %p28 = scmp.eq.s32.totalorder %s16, 1
      %p29 = por %p27, %p28
      %p30 = scmp.ne.s32.totalorder %s21, %s22
      %p31 = scmp.eq.s32.totalorder %s16, 0
      %p32 = por %p30, %p31
      %p33 = scmp.ne.s32.totalorder %s21, %s22
      %p34 = scmp.eq.s32.totalorder %s17, 1
      %p35 = por %p33, %p34
      %p37 = scmp.ne.s32.totalorder %s22, %s36
      %p38 = scmp.eq.s32.totalorder %s17, 0
      %p39 = por %p37, %p38
      %s40 = ssub.s32 %s11, %s18
      %p41 = scmp.eq.s32.totalorder %s40, 0
      %s43 = sadd.s32 %s42, 1
      %s44 = scalar_select %p41, %s42, %s43
      %p47 = pneg %p41
      %p48 = scmp.eq.s32.totalorder %s11, 1
      %p49 = por %p47, %p48
      %p50 = scmp.ne.s32.totalorder %s42, %s45
      %p51 = scmp.eq.s32.totalorder %s11, 0
      %p52 = por %p50, %p51
      %p53 = scmp.ne.s32.totalorder %s42, %s45
      %p54 = scmp.eq.s32.totalorder %s16, 1
      %p55 = por %p53, %p54
      %p56 = scmp.ne.s32.totalorder %s45, %s46
      %p57 = scmp.eq.s32.totalorder %s16, 0
      %p58 = por %p56, %p57
      %p59 = scmp.ne.s32.totalorder %s45, %s46
      %p60 = scmp.eq.s32.totalorder %s17, 1
      %p61 = por %p59, %p60
      %p63 = scmp.ne.s32.totalorder %s46, %s62
      %p64 = scmp.eq.s32.totalorder %s17, 0
      %p65 = por %p63, %p64
      %p66 = scmp.le.s32.totalorder 1, %s11
      %p67 = scmp.lt.s32.totalorder %s11, 3
      %p68 = pnand %p66, %p67
      %p69 = pneg %p68
      // Predicated region
      $region9: #{tpu_custom_call.1} parent=5 // pred_check
        _
      $region10: #{tpu_custom_call.1} parent=5 // pred_check_branch
        %71 = sbr.rel (%p68) target = $region12
      $region11: #{tpu_custom_call.1} parent=5 // pred_region
        %s72 = ssub.s32 %s11, 1
        // Predicated region
        $region13: #{tpu_custom_call.1} parent=11 // pred_check
          %p73 = pneg %p32
        $region14: #{tpu_custom_call.1} parent=11 // pred_check_branch
          %75 = sbr.rel (%p73) target = $region16
        $region15: #{tpu_custom_call.1} parent=11 // pred_region
          %77 = vsyncadd [#allocation3], 0
          %s79 = sshll.u32 %s0, 4
          %s80 = int_to_ptr.hbm [resolvable:$true] %s79
          %s81 = sshll.u32 [#allocation2], 4
          %s82 = int_to_ptr.vmem [resolvable:$true] %s81
          %84 = dma.hbm_to_vmem [thread:$0]  %s80, 128, %s82, [#allocation3]
        $region16: #{tpu_custom_call.1} parent=11 // pred_fallthru
          _
      $region12: #{tpu_custom_call.1} parent=5 // pred_fallthru
        _
      %p85 = scmp.lt.s32.totalorder %s11, 2
      // Predicated region
      $region17: #{tpu_custom_call.1} parent=5 // pred_check
        %p86 = pneg %p85
      $region18: #{tpu_custom_call.1} parent=5 // pred_check_branch
        %88 = sbr.rel (%p86) target = $region20
      $region19: #{tpu_custom_call.1} parent=5 // pred_region
        _
      $region20: #{tpu_custom_call.1} parent=5 // pred_fallthru
        _
      %p89 = scmp.le.s32.totalorder 1, %s11
      %p90 = scmp.lt.s32.totalorder %s11, 3
      %p91 = pnand %p89, %p90
      %p92 = pneg %p91
      // Predicated region
      $region21: #{tpu_custom_call.1} parent=5 // pred_check
        _
      $region22: #{tpu_custom_call.1} parent=5 // pred_check_branch
        %94 = sbr.rel (%p91) target = $region24
      $region23: #{tpu_custom_call.1} parent=5 // pred_region
        %s95 = ssub.s32 %s11, 1
        // Predicated region
        $region25: #{tpu_custom_call.1} parent=23 // pred_check
          %p96 = pneg %p32
        $region26: #{tpu_custom_call.1} parent=23 // pred_check_branch
          %98 = sbr.rel (%p96) target = $region28
        $region27: #{tpu_custom_call.1} parent=23 // pred_region
          %100 = dma.done [#allocation3], 128
        $region28: #{tpu_custom_call.1} parent=23 // pred_fallthru
          _
        %p101 = pneg %p32
        %p102 = pneg %p29
        %p103 = pneg %p58
        %p104 = pneg %p55
        %s105 = sand.u32 %s45, 1
        %s106 = scalar_lea.sflag [#allocation4], %s105
        %s107 = sand.u32 %s45, 1
        %s108 = smul.addr %s107, 8
        %s109 = scalar_lea.vmem [#allocation5], %s108
        %v110 = vld [vmem:[#allocation2] sm:$0xff]
        %111 = vst [vmem:[%s109] sm:$0xff] %v110
        %s112 = sand.u32 %s45, 1
        %s113 = scalar_lea.sflag [#allocation4], %s112
        %s114 = sand.u32 %s45, 1
        %s115 = smul.addr %s114, 8
        %s116 = scalar_lea.vmem [#allocation5], %s115
        // Predicated region
        $region29: #{tpu_custom_call.1} parent=23 // pred_check
          %p117 = pneg %p55
        $region30: #{tpu_custom_call.1} parent=23 // pred_check_branch
          %119 = sbr.rel (%p117) target = $region32
        $region31: #{tpu_custom_call.1} parent=23 // pred_region
          %121 = vsyncadd %s113, 0
          %s122 = smul.addr %s16, 8
          %s123 = scalar_lea.hbm %s1, %s122
          %s125 = sshll.u32 %s116, 4
          %s126 = int_to_ptr.vmem [resolvable:$true] %s125
          %s127 = sshll.u32 %s123, 4
          %s128 = int_to_ptr.hbm [resolvable:$true] %s127
          %130 = dma.vmem_to_hbm [thread:$0]  %s126, 128, %s128, %s113
        $region32: #{tpu_custom_call.1} parent=23 // pred_fallthru
          _
      $region24: #{tpu_custom_call.1} parent=5 // pred_fallthru
        _
      %p131 = scmp.le.s32.totalorder 2, %s11
      // Predicated region
      $region33: #{tpu_custom_call.1} parent=5 // pred_check
        %p132 = pneg %p131
      $region34: #{tpu_custom_call.1} parent=5 // pred_check_branch
        %134 = sbr.rel (%p132) target = $region36
      $region35: #{tpu_custom_call.1} parent=5 // pred_region
        %s135 = ssub.s32 %s11, 2
        // Predicated region
        $region37: #{tpu_custom_call.1} parent=35 // pred_check
          %p136 = pneg %p61
        $region38: #{tpu_custom_call.1} parent=35 // pred_check_branch
          %138 = sbr.rel (%p136) target = $region40
        $region39: #{tpu_custom_call.1} parent=35 // pred_region
          %s139 = sand.u32 %s46, 1
          %s140 = scalar_lea.sflag [#allocation4], %s139
          %s141 = sand.u32 %s46, 1
          %s142 = smul.addr %s141, 8
          %s143 = scalar_lea.vmem [#allocation5], %s142
          %145 = dma.done %s140, 128
        $region40: #{tpu_custom_call.1} parent=35 // pred_fallthru
          _
      $region36: #{tpu_custom_call.1} parent=5 // pred_fallthru
        _
    $region6: #{tpu_custom_call.1} parent=1 // loop_footer
      %s15 = sadd.s32 1, %s11
    $region7: #{tpu_custom_call.1} parent=1 // loop_footer_branch
      %10 = sbr.rel target = $region3
    $region8: #{tpu_custom_call.1} parent=1 // loop_exit
      _
    %146 = vsyncpa [#allocation3], 1
    %s147 = scalar_lea.sflag [#allocation3], 1
    %148 = vsyncpa %s147, 1
    %149 = vsyncpa [#allocation4], 1
    %s150 = scalar_lea.sflag [#allocation4], 1
    %151 = vsyncpa %s150, 1

// kernel: tpu_custom_call.1
$region0: #{tpu_custom_call.1}
  #allocation0 [shape = 'u32[]', space=smem, size = 0x4, offset = 0x4, fixed_abs, tag = 'smem constant byte address 0x4 - core index']
  #allocation1 [shape = 'u32[72,128]{1,0:T(1,128)}', space=vmem, size = 0x9000, scoped, tag = 'internal scratch']
  %s0 = inlined_call_operand.vmem [shape: f32[2,8,32], index: 0, kind: input, shape index: {}]
  %s1 = inlined_call_operand.vmem [shape: f32[2,8,1], index: 1, kind: input, shape index: {}]
  %s2 = inlined_call_operand.vmem [shape: f32[1,32], index: 2, kind: input, shape index: {}]
  %s3 = inlined_call_operand.vmem [shape: f32[1,32], index: 3, kind: input, shape index: {}]
  %s4 = inlined_call_operand.hbm [shape: bf16[32,32], index: 4, kind: input, shape index: {}]
  %s5 = inlined_call_operand.vmem [shape: f32[1,32], index: 5, kind: input, shape index: {}]
  %s6 = inlined_call_operand.hbm [shape: bf16[32,32], index: 6, kind: input, shape index: {}]
  %s7 = inlined_call_operand.vmem [shape: f32[1,32], index: 7, kind: input, shape index: {}]
  %s8 = inlined_call_operand.hbm [shape: bf16[32,32], index: 8, kind: input, shape index: {}]
  %s9 = inlined_call_operand.vmem [shape: f32[1,32], index: 9, kind: input, shape index: {}]
  %s10 = inlined_call_operand.hbm [shape: bf16[2,8,32], index: 10, kind: output, shape index: {0}]
  %s11 = inlined_call_operand.hbm [shape: bf16[2,8,32], index: 11, kind: output, shape index: {1}]
  %s12 = inlined_call_operand.hbm [shape: bf16[2,8,32], index: 12, kind: output, shape index: {2}]
  %13 = xla_tuple %s10, %s11, %s12
  %s14 = sld [smem:[#allocation0]]
  $region101: #{tpu_custom_call.1} parent=0
    _
  %s16 = ssub.s32 1, %s14
  %s17 = scalar_select 0, %s16, %s14
  $region1: #{tpu_custom_call.1} parent=0
    #allocation2 [shape = 'u8[8192]{0}', space=vmem, size = 0x2000, scoped, tag = 'input window, operand 4, single buffered']
    #allocation3 [shape = 's32[2]{0}', space=sflag, size = 0x8, scoped, tag = 'scoped memory for tpu_custom_call.1']
    #allocation4 [shape = 's32[2]{0}', space=sflag, size = 0x8, scoped, tag = 'scoped memory for tpu_custom_call.1']
    #allocation5 [shape = 'u8[8192]{0}', space=vmem, size = 0x2000, scoped, tag = 'input window, operand 6, single buffered']
    #allocation6 [shape = 's32[1]{0}', space=sflag, size = 0x4, scoped, tag = 'scoped memory for tpu_custom_call.1']
    #allocation7 [shape = 'u8[8192]{0}', space=vmem, size = 0x2000, scoped, tag = 'input window, operand 8, single buffered']
    #allocation8 [shape = 'u8[4096]{0}', space=vmem, size = 0x1000, scoped, tag = 'output window, operand 0']
    #allocation9 [shape = 'u8[4096]{0}', space=vmem, size = 0x1000, scoped, tag = 'output window, operand 1']
    #allocation10 [shape = 's32[2]{0}', space=sflag, size = 0x8, scoped, tag = 'scoped memory for tpu_custom_call.1']
    #allocation11 [shape = 'u8[4096]{0}', space=vmem, size = 0x1000, scoped, tag = 'output window, operand 2']
    %18 = vsyncpa [#allocation3], 0
    %19 = vsyncpa [#allocation6], 0
    %20 = vsyncpa [#allocation4], 0
    %s21 = scalar_lea.sflag [#allocation4], 1
    %22 = vsyncpa %s21, 0
    %23 = vsyncpa [#allocation10], 0
    %s24 = scalar_lea.sflag [#allocation10], 1
    %25 = vsyncpa %s24, 0
    loop: start=0, step=1, limit=4
    $region2: #{tpu_custom_call.1} parent=1 // loop_pre_header
      _
    $region3: #{tpu_custom_call.1} parent=1 // loop_header
      %s27 = sphi 0, %s31
      %p28 = scmp.ge.s32.totalorder %s27, 4
      %s34 = sphi 0, %s46
      %s35 = sphi 0, %s42
      %s36 = sphi 0, %s34
      %s37 = sphi 0, %s35
      %s38 = sphi 0, %s36
      %s39 = sphi 0, %s37
      %s51 = sphi 0, %s53
      %s54 = sphi 0, %s51
      %s55 = sphi 0, %s54
      %s71 = sphi 0, %s55
      %s79 = sphi 0, %s81
      %s82 = sphi 0, %s79
      %s83 = sphi 0, %s82
      %s99 = sphi 0, %s83
      %s103 = sphi 0, %s103
      %s105 = sphi 0, %s103
      %s106 = sphi 0, %s105
      %s120 = sphi 0, %s106
      %s124 = sphi 0, %s124
      %s126 = sphi 0, %s124
      %s127 = sphi 0, %s126
      %s141 = sphi 0, %s127
      %s145 = sphi 0, %s145
      %s147 = sphi 0, %s145
      %s148 = sphi 0, %s147
      %s162 = sphi 0, %s148
      %s166 = sphi 0, %s166
      %s168 = sphi 0, %s166
      %s169 = sphi 0, %s168
      %s183 = sphi 0, %s169
      %s187 = sphi 0, %s187
      %s189 = sphi 0, %s187
      %s190 = sphi 0, %s189
      %s204 = sphi 0, %s190
      %s208 = sphi 0, %s208
      %s210 = sphi 0, %s208
      %s211 = sphi 0, %s210
      %s225 = sphi 0, %s211
      %s229 = sphi 0, %s229
      %s231 = sphi 0, %s229
      %s232 = sphi 0, %s231
      %s246 = sphi 0, %s232
      %s250 = sphi 0, %s250
      %s252 = sphi 0, %s250
      %s253 = sphi 0, %s252
      %s267 = sphi 0, %s253
      %s275 = sphi 0, %s277
      %s278 = sphi 0, %s275
      %s279 = sphi 0, %s278
      %s295 = sphi 0, %s279
      %s303 = sphi 0, %s305
      %s306 = sphi 0, %s303
      %s307 = sphi 0, %s306
      %s323 = sphi 0, %s307
      %s331 = sphi 0, %s333
      %s334 = sphi 0, %s331
      %s335 = sphi 0, %s334
      %s351 = sphi 0, %s335
    $region4: #{tpu_custom_call.1} parent=1 // loop_header_branch
      %30 = sbr.rel (%p28) target = $region8
    $region5: #{tpu_custom_call.1} parent=1 // loop_body
      %s32 = ssub.s32 %s27, 1
      %s33 = ssub.s32 %s27, 2
      %s40 = sadd.s32 1, %s35
      %p41 = scmp.ge.s32.totalorder %s40, 1
      %s42 = scalar_select %p41, 0, %s40
      %s43 = sadd.s32 1, %s34
      %s44 = scalar_select %p41, %s43, %s34
      %p45 = scmp.ge.s32.totalorder %s44, 2
      %s46 = scalar_select %p45, 0, %s44
      %s47 = ssub.s32 %s34, %s46
      %s48 = ssub.s32 %s35, %s42
      %s49 = sor.u32 %s47, %s48
      %p50 = scmp.eq.s32.totalorder %s49, 0
      %s52 = sadd.s32 %s51, 1
      %s53 = scalar_select %p50, %s51, %s52
      %p56 = pneg %p50
      %p57 = scmp.eq.s32.totalorder %s27, 1
      %p58 = por %p56, %p57
      %p59 = scmp.ne.s32.totalorder %s51, %s54
      %p60 = scmp.eq.s32.totalorder %s27, 0
      %p61 = por %p59, %p60
      %p62 = scmp.ne.s32.totalorder %s51, %s54
      %p63 = scmp.eq.s32.totalorder %s32, 1
      %p64 = por %p62, %p63
      %p65 = scmp.ne.s32.totalorder %s54, %s55
      %p66 = scmp.eq.s32.totalorder %s32, 0
      %p67 = por %p65, %p66
      %p68 = scmp.ne.s32.totalorder %s54, %s55
      %p69 = scmp.eq.s32.totalorder %s33, 1
      %p70 = por %p68, %p69
      %p72 = scmp.ne.s32.totalorder %s55, %s71
      %p73 = scmp.eq.s32.totalorder %s33, 0
      %p74 = por %p72, %p73
      %s75 = ssub.s32 %s34, %s46
      %s76 = ssub.s32 %s35, %s42
      %s77 = sor.u32 %s75, %s76
      %p78 = scmp.eq.s32.totalorder %s77, 0
      %s80 = sadd.s32 %s79, 1
      %s81 = scalar_select %p78, %s79, %s80
      %p84 = pneg %p78
      %p85 = scmp.eq.s32.totalorder %s27, 1
      %p86 = por %p84, %p85
      %p87 = scmp.ne.s32.totalorder %s79, %s82
      %p88 = scmp.eq.s32.totalorder %s27, 0
      %p89 = por %p87, %p88
      %p90 = scmp.ne.s32.totalorder %s79, %s82
      %p91 = scmp.eq.s32.totalorder %s32, 1
      %p92 = por %p90, %p91
      %p93 = scmp.ne.s32.totalorder %s82, %s83
      %p94 = scmp.eq.s32.totalorder %s32, 0
      %p95 = por %p93, %p94
      %p96 = scmp.ne.s32.totalorder %s82, %s83
      %p97 = scmp.eq.s32.totalorder %s33, 1
      %p98 = por %p96, %p97
      %p100 = scmp.ne.s32.totalorder %s83, %s99
      %p101 = scmp.eq.s32.totalorder %s33, 0
      %p102 = por %p100, %p101
      %s104 = sadd.s32 %s103, 1
      %p107 = scmp.eq.s32.totalorder %s27, 1
      %p108 = scmp.ne.s32.totalorder %s103, %s105
      %p109 = scmp.eq.s32.totalorder %s27, 0
      %p110 = por %p108, %p109
      %p111 = scmp.ne.s32.totalorder %s103, %s105
      %p112 = scmp.eq.s32.totalorder %s32, 1
      %p113 = por %p111, %p112
      %p114 = scmp.ne.s32.totalorder %s105, %s106
      %p115 = scmp.eq.s32.totalorder %s32, 0
      %p116 = por %p114, %p115
      %p117 = scmp.ne.s32.totalorder %s105, %s106
      %p118 = scmp.eq.s32.totalorder %s33, 1
      %p119 = por %p117, %p118
      %p121 = scmp.ne.s32.totalorder %s106, %s120
      %p122 = scmp.eq.s32.totalorder %s33, 0
      %p123 = por %p121, %p122
      %s125 = sadd.s32 %s124, 1
      %p128 = scmp.eq.s32.totalorder %s27, 1
      %p129 = scmp.ne.s32.totalorder %s124, %s126
      %p130 = scmp.eq.s32.totalorder %s27, 0
      %p131 = por %p129, %p130
      %p132 = scmp.ne.s32.totalorder %s124, %s126
      %p133 = scmp.eq.s32.totalorder %s32, 1
      %p134 = por %p132, %p133
      %p135 = scmp.ne.s32.totalorder %s126, %s127
      %p136 = scmp.eq.s32.totalorder %s32, 0
      %p137 = por %p135, %p136
      %p138 = scmp.ne.s32.totalorder %s126, %s127
      %p139 = scmp.eq.s32.totalorder %s33, 1
      %p140 = por %p138, %p139
      %p142 = scmp.ne.s32.totalorder %s127, %s141
      %p143 = scmp.eq.s32.totalorder %s33, 0
      %p144 = por %p142, %p143
      %s146 = sadd.s32 %s145, 1
      %p149 = scmp.eq.s32.totalorder %s27, 1
      %p150 = scmp.ne.s32.totalorder %s145, %s147
      %p151 = scmp.eq.s32.totalorder %s27, 0
      %p152 = por %p150, %p151
      %p153 = scmp.ne.s32.totalorder %s145, %s147
      %p154 = scmp.eq.s32.totalorder %s32, 1
      %p155 = por %p153, %p154
      %p156 = scmp.ne.s32.totalorder %s147, %s148
      %p157 = scmp.eq.s32.totalorder %s32, 0
      %p158 = por %p156, %p157
      %p159 = scmp.ne.s32.totalorder %s147, %s148
      %p160 = scmp.eq.s32.totalorder %s33, 1
      %p161 = por %p159, %p160
      %p163 = scmp.ne.s32.totalorder %s148, %s162
      %p164 = scmp.eq.s32.totalorder %s33, 0
      %p165 = por %p163, %p164
      %s167 = sadd.s32 %s166, 1
      %p170 = scmp.eq.s32.totalorder %s27, 1
      %p171 = scmp.ne.s32.totalorder %s166, %s168
      %p172 = scmp.eq.s32.totalorder %s27, 0
      %p173 = por %p171, %p172
      %p174 = scmp.ne.s32.totalorder %s166, %s168
      %p175 = scmp.eq.s32.totalorder %s32, 1
      %p176 = por %p174, %p175
      %p177 = scmp.ne.s32.totalorder %s168, %s169
      %p178 = scmp.eq.s32.totalorder %s32, 0
      %p179 = por %p177, %p178
      %p180 = scmp.ne.s32.totalorder %s168, %s169
      %p181 = scmp.eq.s32.totalorder %s33, 1
      %p182 = por %p180, %p181
      %p184 = scmp.ne.s32.totalorder %s169, %s183
      %p185 = scmp.eq.s32.totalorder %s33, 0
      %p186 = por %p184, %p185
      %s188 = sadd.s32 %s187, 1
      %p191 = scmp.eq.s32.totalorder %s27, 1
      %p192 = scmp.ne.s32.totalorder %s187, %s189
      %p193 = scmp.eq.s32.totalorder %s27, 0
      %p194 = por %p192, %p193
      %p195 = scmp.ne.s32.totalorder %s187, %s189
      %p196 = scmp.eq.s32.totalorder %s32, 1
      %p197 = por %p195, %p196
      %p198 = scmp.ne.s32.totalorder %s189, %s190
      %p199 = scmp.eq.s32.totalorder %s32, 0
      %p200 = por %p198, %p199
      %p201 = scmp.ne.s32.totalorder %s189, %s190
      %p202 = scmp.eq.s32.totalorder %s33, 1
      %p203 = por %p201, %p202
      %p205 = scmp.ne.s32.totalorder %s190, %s204
      %p206 = scmp.eq.s32.totalorder %s33, 0
      %p207 = por %p205, %p206
      %s209 = sadd.s32 %s208, 1
      %p212 = scmp.eq.s32.totalorder %s27, 1
      %p213 = scmp.ne.s32.totalorder %s208, %s210
      %p214 = scmp.eq.s32.totalorder %s27, 0
      %p215 = por %p213, %p214
      %p216 = scmp.ne.s32.totalorder %s208, %s210
      %p217 = scmp.eq.s32.totalorder %s32, 1
      %p218 = por %p216, %p217
      %p219 = scmp.ne.s32.totalorder %s210, %s211
      %p220 = scmp.eq.s32.totalorder %s32, 0
      %p221 = por %p219, %p220
      %p222 = scmp.ne.s32.totalorder %s210, %s211
      %p223 = scmp.eq.s32.totalorder %s33, 1
      %p224 = por %p222, %p223
      %p226 = scmp.ne.s32.totalorder %s211, %s225
      %p227 = scmp.eq.s32.totalorder %s33, 0
      %p228 = por %p226, %p227
      %s230 = sadd.s32 %s229, 1
      %p233 = scmp.eq.s32.totalorder %s27, 1
      %p234 = scmp.ne.s32.totalorder %s229, %s231
      %p235 = scmp.eq.s32.totalorder %s27, 0
      %p236 = por %p234, %p235
      %p237 = scmp.ne.s32.totalorder %s229, %s231
      %p238 = scmp.eq.s32.totalorder %s32, 1
      %p239 = por %p237, %p238
      %p240 = scmp.ne.s32.totalorder %s231, %s232
      %p241 = scmp.eq.s32.totalorder %s32, 0
      %p242 = por %p240, %p241
      %p243 = scmp.ne.s32.totalorder %s231, %s232
      %p244 = scmp.eq.s32.totalorder %s33, 1
      %p245 = por %p243, %p244
      %p247 = scmp.ne.s32.totalorder %s232, %s246
      %p248 = scmp.eq.s32.totalorder %s33, 0
      %p249 = por %p247, %p248
      %s251 = sadd.s32 %s250, 1
      %p254 = scmp.eq.s32.totalorder %s27, 1
      %p255 = scmp.ne.s32.totalorder %s250, %s252
      %p256 = scmp.eq.s32.totalorder %s27, 0
      %p257 = por %p255, %p256
      %p258 = scmp.ne.s32.totalorder %s250, %s252
      %p259 = scmp.eq.s32.totalorder %s32, 1
      %p260 = por %p258, %p259
      %p261 = scmp.ne.s32.totalorder %s252, %s253
      %p262 = scmp.eq.s32.totalorder %s32, 0
      %p263 = por %p261, %p262
      %p264 = scmp.ne.s32.totalorder %s252, %s253
      %p265 = scmp.eq.s32.totalorder %s33, 1
      %p266 = por %p264, %p265
      %p268 = scmp.ne.s32.totalorder %s253, %s267
      %p269 = scmp.eq.s32.totalorder %s33, 0
      %p270 = por %p268, %p269
      %s271 = ssub.s32 %s34, %s46
      %s272 = ssub.s32 %s35, %s42
      %s273 = sor.u32 %s271, %s272
      %p274 = scmp.eq.s32.totalorder %s273, 0
      %s276 = sadd.s32 %s275, 1
      %s277 = scalar_select %p274, %s275, %s276
      %p280 = pneg %p274
      %p281 = scmp.eq.s32.totalorder %s27, 1
      %p282 = por %p280, %p281
      %p283 = scmp.ne.s32.totalorder %s275, %s278
      %p284 = scmp.eq.s32.totalorder %s27, 0
      %p285 = por %p283, %p284
      %p286 = scmp.ne.s32.totalorder %s275, %s278
      %p287 = scmp.eq.s32.totalorder %s32, 1
      %p288 = por %p286, %p287
      %p289 = scmp.ne.s32.totalorder %s278, %s279
      %p290 = scmp.eq.s32.totalorder %s32, 0
      %p291 = por %p289, %p290
      %p292 = scmp.ne.s32.totalorder %s278, %s279
      %p293 = scmp.eq.s32.totalorder %s33, 1
      %p294 = por %p292, %p293
      %p296 = scmp.ne.s32.totalorder %s279, %s295
      %p297 = scmp.eq.s32.totalorder %s33, 0
      %p298 = por %p296, %p297
      %s299 = ssub.s32 %s34, %s46
      %s300 = ssub.s32 %s35, %s42
      %s301 = sor.u32 %s299, %s300
      %p302 = scmp.eq.s32.totalorder %s301, 0
      %s304 = sadd.s32 %s303, 1
      %s305 = scalar_select %p302, %s303, %s304
      %p308 = pneg %p302
      %p309 = scmp.eq.s32.totalorder %s27, 1
      %p310 = por %p308, %p309
      %p311 = scmp.ne.s32.totalorder %s303, %s306
      %p312 = scmp.eq.s32.totalorder %s27, 0
      %p313 = por %p311, %p312
      %p314 = scmp.ne.s32.totalorder %s303, %s306
      %p315 = scmp.eq.s32.totalorder %s32, 1
      %p316 = por %p314, %p315
      %p317 = scmp.ne.s32.totalorder %s306, %s307
      %p318 = scmp.eq.s32.totalorder %s32, 0
      %p319 = por %p317, %p318
      %p320 = scmp.ne.s32.totalorder %s306, %s307
      %p321 = scmp.eq.s32.totalorder %s33, 1
      %p322 = por %p320, %p321
      %p324 = scmp.ne.s32.totalorder %s307, %s323
      %p325 = scmp.eq.s32.totalorder %s33, 0
      %p326 = por %p324, %p325
      %s327 = ssub.s32 %s34, %s46
      %s328 = ssub.s32 %s35, %s42
      %s329 = sor.u32 %s327, %s328
      %p330 = scmp.eq.s32.totalorder %s329, 0
      %s332 = sadd.s32 %s331, 1
      %s333 = scalar_select %p330, %s331, %s332
      %p336 = pneg %p330
      %p337 = scmp.eq.s32.totalorder %s27, 1
      %p338 = por %p336, %p337
      %p339 = scmp.ne.s32.totalorder %s331, %s334
      %p340 = scmp.eq.s32.totalorder %s27, 0
      %p341 = por %p339, %p340
      %p342 = scmp.ne.s32.totalorder %s331, %s334
      %p343 = scmp.eq.s32.totalorder %s32, 1
      %p344 = por %p342, %p343
      %p345 = scmp.ne.s32.totalorder %s334, %s335
      %p346 = scmp.eq.s32.totalorder %s32, 0
      %p347 = por %p345, %p346
      %p348 = scmp.ne.s32.totalorder %s334, %s335
      %p349 = scmp.eq.s32.totalorder %s33, 1
      %p350 = por %p348, %p349
      %p352 = scmp.ne.s32.totalorder %s335, %s351
      %p353 = scmp.eq.s32.totalorder %s33, 0
      %p354 = por %p352, %p353
      %p355 = scmp.le.s32.totalorder 1, %s27
      %p356 = scmp.lt.s32.totalorder %s27, 3
      %p357 = pnand %p355, %p356
      %p358 = pneg %p357
      // Predicated region
      $region9: #{tpu_custom_call.1} parent=5 // pred_check
        _
      $region10: #{tpu_custom_call.1} parent=5 // pred_check_branch
        %360 = sbr.rel (%p357) target = $region12
      $region11: #{tpu_custom_call.1} parent=5 // pred_region
        %s361 = ssub.s32 %s27, 1
        // Predicated region
        $region13: #{tpu_custom_call.1} parent=11 // pred_check
          %p362 = pneg %p116
        $region14: #{tpu_custom_call.1} parent=11 // pred_check_branch
          %364 = sbr.rel (%p362) target = $region16
        $region15: #{tpu_custom_call.1} parent=11 // pred_region
          _
        $region16: #{tpu_custom_call.1} parent=11 // pred_fallthru
          _
        // Predicated region
        $region17: #{tpu_custom_call.1} parent=11 // pred_check
          %p365 = pneg %p137
        $region18: #{tpu_custom_call.1} parent=11 // pred_check_branch
          %367 = sbr.rel (%p365) target = $region20
        $region19: #{tpu_custom_call.1} parent=11 // pred_region
          _
        $region20: #{tpu_custom_call.1} parent=11 // pred_fallthru
          _
        // Predicated region
        $region21: #{tpu_custom_call.1} parent=11 // pred_check
          %p368 = pneg %p158
        $region22: #{tpu_custom_call.1} parent=11 // pred_check_branch
          %370 = sbr.rel (%p368) target = $region24
        $region23: #{tpu_custom_call.1} parent=11 // pred_region
          %372 = vsyncadd [#allocation3], 0
          %s373 = sshll.u32 %s4, 4
          %s374 = int_to_ptr.hbm [resolvable:$true] %s373
          %s375 = sshll.u32 [#allocation2], 4
          %s376 = int_to_ptr.vmem [resolvable:$true] %s375
          %381 = dma.hbm_to_vmem [thread:$0]  %s374, 256, %s376, [#allocation3], 64, 64, 4
        $region24: #{tpu_custom_call.1} parent=11 // pred_fallthru
          _
        // Predicated region
        $region25: #{tpu_custom_call.1} parent=11 // pred_check
          %p382 = pneg %p179
        $region26: #{tpu_custom_call.1} parent=11 // pred_check_branch
          %384 = sbr.rel (%p382) target = $region28
        $region27: #{tpu_custom_call.1} parent=11 // pred_region
          _
        $region28: #{tpu_custom_call.1} parent=11 // pred_fallthru
          _
        // Predicated region
        $region29: #{tpu_custom_call.1} parent=11 // pred_check
          %p385 = pneg %p200
        $region30: #{tpu_custom_call.1} parent=11 // pred_check_branch
          %387 = sbr.rel (%p385) target = $region32
        $region31: #{tpu_custom_call.1} parent=11 // pred_region
          %389 = vsyncadd [#allocation6], 0
          %s390 = sshll.u32 %s6, 4
          %s391 = int_to_ptr.hbm [resolvable:$true] %s390
          %s392 = sshll.u32 [#allocation5], 4
          %s393 = int_to_ptr.vmem [resolvable:$true] %s392
          %398 = dma.hbm_to_vmem [thread:$0]  %s391, 256, %s393, [#allocation6], 64, 64, 4
        $region32: #{tpu_custom_call.1} parent=11 // pred_fallthru
          _
        // Predicated region
        $region33: #{tpu_custom_call.1} parent=11 // pred_check
          %p399 = pneg %p221
        $region34: #{tpu_custom_call.1} parent=11 // pred_check_branch
          %401 = sbr.rel (%p399) target = $region36
        $region35: #{tpu_custom_call.1} parent=11 // pred_region
          _
        $region36: #{tpu_custom_call.1} parent=11 // pred_fallthru
          _
        // Predicated region
        $region37: #{tpu_custom_call.1} parent=11 // pred_check
          %p402 = pneg %p242
        $region38: #{tpu_custom_call.1} parent=11 // pred_check_branch
          %404 = sbr.rel (%p402) target = $region40
        $region39: #{tpu_custom_call.1} parent=11 // pred_region
          %406 = vsyncadd [#allocation6], 0
          %s407 = sshll.u32 %s8, 4
          %s408 = int_to_ptr.hbm [resolvable:$true] %s407
          %s409 = sshll.u32 [#allocation7], 4
          %s410 = int_to_ptr.vmem [resolvable:$true] %s409
          %415 = dma.hbm_to_vmem [thread:$0]  %s408, 256, %s410, [#allocation6], 64, 64, 4
        $region40: #{tpu_custom_call.1} parent=11 // pred_fallthru
          _
        // Predicated region
        $region41: #{tpu_custom_call.1} parent=11 // pred_check
          %p416 = pneg %p263
        $region42: #{tpu_custom_call.1} parent=11 // pred_check_branch
          %418 = sbr.rel (%p416) target = $region44
        $region43: #{tpu_custom_call.1} parent=11 // pred_region
          _
        $region44: #{tpu_custom_call.1} parent=11 // pred_fallthru
          _
      $region12: #{tpu_custom_call.1} parent=5 // pred_fallthru
        _
      %p419 = scmp.lt.s32.totalorder %s27, 2
      // Predicated region
      $region45: #{tpu_custom_call.1} parent=5 // pred_check
        %p420 = pneg %p419
      $region46: #{tpu_custom_call.1} parent=5 // pred_check_branch
        %422 = sbr.rel (%p420) target = $region48
      $region47: #{tpu_custom_call.1} parent=5 // pred_region
        // Predicated region
        $region49: #{tpu_custom_call.1} parent=47 // pred_check
          %p423 = pneg %p61
        $region50: #{tpu_custom_call.1} parent=47 // pred_check_branch
          %425 = sbr.rel (%p423) target = $region52
        $region51: #{tpu_custom_call.1} parent=47 // pred_region
          %p426 = scmp.lt.s32.totalorder %s34, 1
          %s427 = scalar_select %p426, %s34, 1
          %p428 = scmp.lt.s32.totalorder %s35, 0
          %s429 = scalar_select %p428, %s35, 0
          %s430 = sadd.s32 %s429, %s427
          %s431 = smul.addr %s430, 8
          %s432 = scalar_lea.vmem %s0, %s431
        $region52: #{tpu_custom_call.1} parent=47 // pred_fallthru
          _
        // Predicated region
        $region53: #{tpu_custom_call.1} parent=47 // pred_check
          %p433 = pneg %p89
        $region54: #{tpu_custom_call.1} parent=47 // pred_check_branch
          %435 = sbr.rel (%p433) target = $region56
        $region55: #{tpu_custom_call.1} parent=47 // pred_region
          %p436 = scmp.lt.s32.totalorder %s34, 1
          %s437 = scalar_select %p436, %s34, 1
          %p438 = scmp.lt.s32.totalorder %s35, 0
          %s439 = scalar_select %p438, %s35, 0
          %s440 = sadd.s32 %s439, %s437
          %s441 = smul.addr %s440, 8
          %s442 = scalar_lea.vmem %s1, %s441
        $region56: #{tpu_custom_call.1} parent=47 // pred_fallthru
          _
      $region48: #{tpu_custom_call.1} parent=5 // pred_fallthru
        _
      %p443 = scmp.le.s32.totalorder 1, %s27
      %p444 = scmp.lt.s32.totalorder %s27, 3
      %p445 = pnand %p443, %p444
      %p446 = pneg %p445
      // Predicated region
      $region57: #{tpu_custom_call.1} parent=5 // pred_check
        _
      $region58: #{tpu_custom_call.1} parent=5 // pred_check_branch
        %448 = sbr.rel (%p445) target = $region60
      $region59: #{tpu_custom_call.1} parent=5 // pred_region
        %s449 = ssub.s32 %s27, 1
        // Predicated region
        $region61: #{tpu_custom_call.1} parent=59 // pred_check
          %p450 = pneg %p158
        $region62: #{tpu_custom_call.1} parent=59 // pred_check_branch
          %452 = sbr.rel (%p450) target = $region64
        $region63: #{tpu_custom_call.1} parent=59 // pred_region
          %454 = dma.done [#allocation3], 256
        $region64: #{tpu_custom_call.1} parent=59 // pred_fallthru
          _
        // Predicated region
        $region65: #{tpu_custom_call.1} parent=59 // pred_check
          %p455 = pneg %p200
        $region66: #{tpu_custom_call.1} parent=59 // pred_check_branch
          %457 = sbr.rel (%p455) target = $region68
        $region67: #{tpu_custom_call.1} parent=59 // pred_region
          %459 = dma.done [#allocation6], 256
        $region68: #{tpu_custom_call.1} parent=59 // pred_fallthru
          _
        // Predicated region
        $region69: #{tpu_custom_call.1} parent=59 // pred_check
          %p460 = pneg %p242
        $region70: #{tpu_custom_call.1} parent=59 // pred_check_branch
          %462 = sbr.rel (%p460) target = $region72
        $region71: #{tpu_custom_call.1} parent=59 // pred_region
          %464 = dma.done [#allocation6], 256
        $region72: #{tpu_custom_call.1} parent=59 // pred_fallthru
          _
        %p465 = scmp.lt.s32.totalorder %s36, 1
        %s466 = scalar_select %p465, %s36, 1
        %p467 = scmp.lt.s32.totalorder %s37, 0
        %s468 = scalar_select %p467, %s37, 0
        %s469 = sadd.s32 %s468, %s466
        %s470 = smul.addr %s469, 8
        %s471 = scalar_lea.vmem %s0, %s470
        %p472 = pneg %p67
        %p473 = pneg %p64
        %p474 = scmp.lt.s32.totalorder %s36, 1
        %s475 = scalar_select %p474, %s36, 1
        %p476 = scmp.lt.s32.totalorder %s37, 0
        %s477 = scalar_select %p476, %s37, 0
        %s478 = sadd.s32 %s477, %s475
        %s479 = smul.addr %s478, 8
        %s480 = scalar_lea.vmem %s1, %s479
        %p481 = pneg %p95
        %p482 = pneg %p92
        %p483 = pneg %p116
        %p484 = pneg %p113
        %p485 = pneg %p137
        %p486 = pneg %p134
        %p487 = pneg %p158
        %p488 = pneg %p155
        %p489 = pneg %p179
        %p490 = pneg %p176
        %p491 = pneg %p200
        %p492 = pneg %p197
        %p493 = pneg %p221
        %p494 = pneg %p218
        %p495 = pneg %p242
        %p496 = pneg %p239
        %p497 = pneg %p263
        %p498 = pneg %p260
        %p499 = pneg %p291
        %p500 = pneg %p288
        %s501 = sand.u32 %s278, 1
        %s502 = scalar_lea.sflag [#allocation4], %s501
        %s503 = sand.u32 %s278, 1
        %s504 = smul.addr %s503, 4
        %s505 = scalar_lea.vmem [#allocation8], %s504
        %p506 = pneg %p319
        %p507 = pneg %p316
        %s508 = sand.u32 %s32, 1
        %s509 = scalar_lea.sflag [#allocation10], %s508
        %s510 = sand.u32 %s306, 1
        %s511 = smul.addr %s510, 4
        %s512 = scalar_lea.vmem [#allocation9], %s511
        %p513 = pneg %p347
        %p514 = pneg %p344
        %s515 = sand.u32 %s32, 1
        %s516 = scalar_lea.sflag [#allocation10], %s515
        %s517 = sand.u32 %s334, 1
        %s518 = smul.addr %s517, 4
        %s519 = scalar_lea.vmem [#allocation11], %s518
        %p520 = scmp.lt.s32.totalorder %s36, 1
        %s521 = scalar_select %p520, %s36, 1
        %p522 = scmp.lt.s32.totalorder %s37, 0
        %s523 = scalar_select %p522, %s37, 0
        %s524 = sadd.s32 %s523, %s521
        %s525 = smul.addr %s524, 8
        %s526 = scalar_lea.vmem %s0, %s525
        %p527 = scmp.lt.s32.totalorder %s36, 1
        %s528 = scalar_select %p527, %s36, 1
        %p529 = scmp.lt.s32.totalorder %s37, 0
        %s530 = scalar_select %p529, %s37, 0
        %s531 = sadd.s32 %s530, %s528
        %s532 = smul.addr %s531, 8
        %s533 = scalar_lea.vmem %s1, %s532
        %v535 = vld [vmem:[%s526] sm:$0xff]
        %v536 = vld [vmem:[%s2] sm:$0x1]
        %v537 = vld [vmem:[%s3] sm:$0x1]
        %vm538 = vcmask 261120
        %v539 = vsel %vm538, %v535, 0.0
        %540 = vadd.xlane.f32.xlu0 %v539
        %v541 = vpop.xlane.xlu0 %540
        %v542 = vrcp.pop 32.0
        %v543 = vmul.f32 32.0, %v542
        %v544 = vsub.f32 1.0, %v543
        %v545 = vmul.f32 %v542, %v544
        %v546 = vadd.f32 %v542, %v545
        %vm547 = vweird.f32 %v542
        %v548 = vsel %vm547, %v542, %v546
        %v549 = vmul.f32 %v541, %v548
        %v550 = vsub.f32 %v535, %v549
        %v551 = vmul.f32 %v550, %v550
        %v552 = vsel %vm538, %v551, 0.0
        %553 = vadd.xlane.f32.xlu0 %v552
        %v554 = vpop.xlane.xlu0 %553
        %v555 = vmul.f32 %v554, %v548
        %v556 = vadd.f32 %v555, 1e-06
        %v557 = vrsqrt.pop %v556
        %v558 = vmul.f32 %v557, %v556
        %v559 = vmul.f32 %v558, %v557
        %v560 = vmul.f32 0.5, %v559
        %v561 = vsub.f32 1.5, %v560
        %v562 = vmul.f32 %v557, %v561
        %vm563 = vweird.f32 %v556
        %vm564 = vweird.f32 %v557
        %vm565 = vmor %vm563, %vm564
        %v566 = vsel %vm565, %v557, %v562
        %v567 = vmul.f32 %v550, %v566
        %v569 = vperm.slane %v536, 0
        %v571 = vmul.f32 %v567, %v569
        %v573 = vperm.slane %v537, 0
        %v575 = vadd.f32 %v571, %v573
        %v576 = vpack.c.bf16 %v575, %v575
        %v577 = vld [vmem:[#allocation2] sm:$0xf]
        %v578 = vld [vmem:[#allocation2 + $0x4] sm:$0xf]
        %v579 = vld [vmem:[#allocation2 + $0x8] sm:$0xf]
        %v580 = vld [vmem:[#allocation2 + $0xc] sm:$0xf]
        %v581 = vld [vmem:[%s5] sm:$0x1]
        %v583 = vperm.slane %v581, 0
        %v589 = vunpack.c.l.b16 %v577
        %v590 = vunpack.c.l.b16 %v578
        %v591 = vunpack.c.l.b16 %v579
        %v592 = vunpack.c.l.b16 %v580
        %v593 = vpack.c.b16 %v590, %v589
        %v594 = vpack.c.b16 %v592, %v591
        %v598 = vsel %vm538, %v576, 0
        %600 = vmatpush.bf16.msra.mxu0 0
        %601 = vmatpush.bf16.msra.mxu0 0
        %602 = vmatpush.bf16.msra.mxu0 0
        %603 = vmatpush.bf16.msra.mxu0 0
        %604 = vmatpush.bf16.msra.mxu0 0
        %605 = vmatpush.bf16.msra.mxu0 0
        %606 = vmatpush.bf16.msra.mxu0 %v594
        %607 = vmatpush.bf16.msra.mxu0 %v593
        %608 = vmatmul.bf16.gmra.mxu0 %v598
        %v609 = vpop.f32.mrf.mxu0
        %v610 = vadd.f32 %v583, %v609
        %v611 = vpop.f32.mrf.mxu0
        %612 = vdwg.mxu0
        %v613 = vld [vmem:[#allocation5] sm:$0xf]
        %v614 = vld [vmem:[#allocation5 + $0x4] sm:$0xf]
        %v615 = vld [vmem:[#allocation5 + $0x8] sm:$0xf]
        %v616 = vld [vmem:[#allocation5 + $0xc] sm:$0xf]
        %v617 = vld [vmem:[%s7] sm:$0x1]
        %v619 = vperm.slane %v617, 0
        %v625 = vunpack.c.l.b16 %v613
        %v626 = vunpack.c.l.b16 %v614
        %v627 = vunpack.c.l.b16 %v615
        %v628 = vunpack.c.l.b16 %v616
        %v629 = vpack.c.b16 %v626, %v625
        %v630 = vpack.c.b16 %v628, %v627
        %633 = vmatpush.bf16.msra.mxu0 0
        %634 = vmatpush.bf16.msra.mxu0 0
        %635 = vmatpush.bf16.msra.mxu0 0
        %636 = vmatpush.bf16.msra.mxu0 0
        %637 = vmatpush.bf16.msra.mxu0 0
        %638 = vmatpush.bf16.msra.mxu0 0
        %639 = vmatpush.bf16.msra.mxu0 %v630
        %640 = vmatpush.bf16.msra.mxu0 %v629
        %641 = vmatmul.bf16.gmra.mxu0 %v598
        %v642 = vpop.f32.mrf.mxu0
        %v643 = vadd.f32 %v619, %v642
        %v644 = vpop.f32.mrf.mxu0
        %645 = vdwg.mxu0
        %v646 = vld [vmem:[#allocation7] sm:$0xf]
        %v647 = vld [vmem:[#allocation7 + $0x4] sm:$0xf]
        %v648 = vld [vmem:[#allocation7 + $0x8] sm:$0xf]
        %v649 = vld [vmem:[#allocation7 + $0xc] sm:$0xf]
        %v650 = vld [vmem:[%s9] sm:$0x1]
        %v652 = vperm.slane %v650, 0
        %v658 = vunpack.c.l.b16 %v646
        %v659 = vunpack.c.l.b16 %v647
        %v660 = vunpack.c.l.b16 %v648
        %v661 = vunpack.c.l.b16 %v649
        %v662 = vpack.c.b16 %v659, %v658
        %v663 = vpack.c.b16 %v661, %v660
        %666 = vmatpush.bf16.msra.mxu0 0
        %667 = vmatpush.bf16.msra.mxu0 0
        %668 = vmatpush.bf16.msra.mxu0 0
        %669 = vmatpush.bf16.msra.mxu0 0
        %670 = vmatpush.bf16.msra.mxu0 0
        %671 = vmatpush.bf16.msra.mxu0 0
        %672 = vmatpush.bf16.msra.mxu0 %v663
        %673 = vmatpush.bf16.msra.mxu0 %v662
        %674 = vmatmul.bf16.gmra.mxu0 %v598
        %v675 = vpop.f32.mrf.mxu0
        %v676 = vadd.f32 %v652, %v675
        %v677 = vpop.f32.mrf.mxu0
        %678 = vdwg.mxu0
        %v679 = vld [vmem:[%s533] sm:$0xff]
        %vm680 = vcmp.eq.f32.partialorder %v679, 0.0
        %v681 = vsel %vm680, 1, 0
        %682 = vset.pattern.permute.xlu0 0
        %683 = vperm.xlu0 %682, %v681
        %v684 = vpop.permute.xlu0 %683
        %vm685 = vcmp.eq.s32.totalorder %v684, 1
        %v686 = vsel %vm685, 0.0, %v610
        %v687 = vpack.c.bf16 %v686, %v686
        %vm688 = vcmask 257024
        %689 = vst.msk [vmem:[%s505] sm:$0xf] %vm688, %v687
        %v690 = vpack.c.bf16 %v643, %v643
        %691 = vst.msk [vmem:[%s512] sm:$0xf] %vm688, %v690
        %v692 = vpack.c.bf16 %v676, %v676
        %693 = vst.msk [vmem:[%s519] sm:$0xf] %vm688, %v692
        %s694 = sand.u32 %s278, 1
        %s695 = scalar_lea.sflag [#allocation4], %s694
        %s696 = sand.u32 %s278, 1
        %s697 = smul.addr %s696, 4
        %s698 = scalar_lea.vmem [#allocation8], %s697
        %s699 = sand.u32 %s32, 1
        %s700 = scalar_lea.sflag [#allocation10], %s699
        %s701 = sand.u32 %s306, 1
        %s702 = smul.addr %s701, 4
        %s703 = scalar_lea.vmem [#allocation9], %s702
        %s704 = sand.u32 %s32, 1
        %s705 = scalar_lea.sflag [#allocation10], %s704
        %s706 = sand.u32 %s334, 1
        %s707 = smul.addr %s706, 4
        %s708 = scalar_lea.vmem [#allocation11], %s707
        // Predicated region
        $region73: #{tpu_custom_call.1} parent=59 // pred_check
          %p709 = pneg %p288
        $region74: #{tpu_custom_call.1} parent=59 // pred_check_branch
          %711 = sbr.rel (%p709) target = $region76
        $region75: #{tpu_custom_call.1} parent=59 // pred_region
          %713 = vsyncadd %s695, 0
          %s714 = sadd.s32 %s37, %s36
          %s715 = smul.addr %s714, 4
          %s716 = scalar_lea.hbm %s10, %s715
          %s718 = sshll.u32 %s698, 4
          %s719 = int_to_ptr.vmem [resolvable:$true] %s718
          %s720 = sshll.u32 %s716, 4
          %s721 = int_to_ptr.hbm [resolvable:$true] %s720
          %723 = dma.vmem_to_hbm [thread:$0]  %s719, 64, %s721, %s695
        $region76: #{tpu_custom_call.1} parent=59 // pred_fallthru
          _
        // Predicated region
        $region77: #{tpu_custom_call.1} parent=59 // pred_check
          %p724 = pneg %p316
        $region78: #{tpu_custom_call.1} parent=59 // pred_check_branch
          %726 = sbr.rel (%p724) target = $region80
        $region79: #{tpu_custom_call.1} parent=59 // pred_region
          %728 = vsyncadd %s700, 0
          %s729 = sadd.s32 %s37, %s36
          %s730 = smul.addr %s729, 4
          %s731 = scalar_lea.hbm %s11, %s730
          %s733 = sshll.u32 %s703, 4
          %s734 = int_to_ptr.vmem [resolvable:$true] %s733
          %s735 = sshll.u32 %s731, 4
          %s736 = int_to_ptr.hbm [resolvable:$true] %s735
          %738 = dma.vmem_to_hbm [thread:$0]  %s734, 64, %s736, %s700
        $region80: #{tpu_custom_call.1} parent=59 // pred_fallthru
          _
        // Predicated region
        $region81: #{tpu_custom_call.1} parent=59 // pred_check
          %p739 = pneg %p344
        $region82: #{tpu_custom_call.1} parent=59 // pred_check_branch
          %741 = sbr.rel (%p739) target = $region84
        $region83: #{tpu_custom_call.1} parent=59 // pred_region
          %743 = vsyncadd %s705, 0
          %s744 = sadd.s32 %s37, %s36
          %s745 = smul.addr %s744, 4
          %s746 = scalar_lea.hbm %s12, %s745
          %s748 = sshll.u32 %s708, 4
          %s749 = int_to_ptr.vmem [resolvable:$true] %s748
          %s750 = sshll.u32 %s746, 4
          %s751 = int_to_ptr.hbm [resolvable:$true] %s750
          %753 = dma.vmem_to_hbm [thread:$0]  %s749, 64, %s751, %s705
        $region84: #{tpu_custom_call.1} parent=59 // pred_fallthru
          _
      $region60: #{tpu_custom_call.1} parent=5 // pred_fallthru
        _
      %p754 = scmp.le.s32.totalorder 2, %s27
      // Predicated region
      $region85: #{tpu_custom_call.1} parent=5 // pred_check
        %p755 = pneg %p754
      $region86: #{tpu_custom_call.1} parent=5 // pred_check_branch
        %757 = sbr.rel (%p755) target = $region88
      $region87: #{tpu_custom_call.1} parent=5 // pred_region
        %s758 = ssub.s32 %s27, 2
        // Predicated region
        $region89: #{tpu_custom_call.1} parent=87 // pred_check
          %p759 = pneg %p294
        $region90: #{tpu_custom_call.1} parent=87 // pred_check_branch
          %761 = sbr.rel (%p759) target = $region92
        $region91: #{tpu_custom_call.1} parent=87 // pred_region
          %s762 = sand.u32 %s279, 1
          %s763 = scalar_lea.sflag [#allocation4], %s762
          %s764 = sand.u32 %s279, 1
          %s765 = smul.addr %s764, 4
          %s766 = scalar_lea.vmem [#allocation8], %s765
          %768 = dma.done %s763, 64
        $region92: #{tpu_custom_call.1} parent=87 // pred_fallthru
          _
        // Predicated region
        $region93: #{tpu_custom_call.1} parent=87 // pred_check
          %p769 = pneg %p322
        $region94: #{tpu_custom_call.1} parent=87 // pred_check_branch
          %771 = sbr.rel (%p769) target = $region96
        $region95: #{tpu_custom_call.1} parent=87 // pred_region
          %s772 = sand.u32 %s33, 1
          %s773 = scalar_lea.sflag [#allocation10], %s772
          %s774 = sand.u32 %s307, 1
          %s775 = smul.addr %s774, 4
          %s776 = scalar_lea.vmem [#allocation9], %s775
          %778 = dma.done %s773, 64
        $region96: #{tpu_custom_call.1} parent=87 // pred_fallthru
          _
        // Predicated region
        $region97: #{tpu_custom_call.1} parent=87 // pred_check
          %p779 = pneg %p350
        $region98: #{tpu_custom_call.1} parent=87 // pred_check_branch
          %781 = sbr.rel (%p779) target = $region100
        $region99: #{tpu_custom_call.1} parent=87 // pred_region
          %s782 = sand.u32 %s33, 1
          %s783 = scalar_lea.sflag [#allocation10], %s782
          %s784 = sand.u32 %s335, 1
          %s785 = smul.addr %s784, 4
          %s786 = scalar_lea.vmem [#allocation11], %s785
          %788 = dma.done %s783, 64
        $region100: #{tpu_custom_call.1} parent=87 // pred_fallthru
          _
      $region88: #{tpu_custom_call.1} parent=5 // pred_fallthru
        _
    $region6: #{tpu_custom_call.1} parent=1 // loop_footer
      %s31 = sadd.s32 1, %s27
    $region7: #{tpu_custom_call.1} parent=1 // loop_footer_branch
      %26 = sbr.rel target = $region3
    $region8: #{tpu_custom_call.1} parent=1 // loop_exit
      _
    %789 = vsyncpa [#allocation3], 1
    %s790 = scalar_lea.sflag [#allocation3], 1
    %791 = vsyncpa %s790, 1
    %792 = vsyncpa [#allocation6], 1
    %793 = vsyncpa [#allocation4], 1
    %s794 = scalar_lea.sflag [#allocation4], 1
    %795 = vsyncpa %s794, 1
    %796 = vsyncpa [#allocation10], 1
    %s797 = scalar_lea.sflag [#allocation10], 1
    %798 = vsyncpa %s797, 1

</llo_original>
